<compile_context>
chip_gen: v7x
topology: tpu7x:2x2x1
jax: 0.10.0
libtpu: 0.0.40
codegen_flags: <defaults>
</compile_context>

<pallas_src>
import functools
import math

import jax
import jax.numpy as jnp
from jax.experimental import pallas as pl
from jax.experimental.pallas import tpu as pltpu


def _round_up(x, m):
    return (x + m - 1) // m * m


def _normalize_kernel(emb_ref, z_ref, *, n_true, d_true, n_pad, d_pad, tq):
    """z = F.normalize(exp(emb), dim=1); padded rows/cols forced to exactly 0."""
    t = pl.program_id(1)
    x = jnp.exp(emb_ref[...].astype(jnp.float32))            # (tq, d_pad)
    if d_true < d_pad or n_true < n_pad:
        col = jax.lax.broadcasted_iota(jnp.int32, x.shape, 1)
        row = t * tq + jax.lax.broadcasted_iota(jnp.int32, x.shape, 0)
        x = jnp.where((col < d_true) & (row < n_true), x, 0.0)
    norm2 = jnp.sum(x * x, axis=1, keepdims=True)
    # 1 / max(||x||, 1e-12)  (PyTorch F.normalize eps); padded rows -> 0.
    z_ref[...] = x * jax.lax.rsqrt(jnp.maximum(norm2, 1e-24))


def _ntxent_kernel(reps_ref, out_ref, acc_ref, *, n_true, n_pad, tq,
                   temperature):
    h = pl.program_id(0)          # which half of the stacked reps (z_i / z_j)
    t = pl.program_id(1)          # row tile within the half

    @pl.when((h == 0) & (t == 0))
    def _init():
        acc_ref[0] = 0.0

    inv_t = 1.0 / temperature

    row0 = pl.multiple_of(h * n_pad + t * tq, tq)            # query rows
    prt0 = pl.multiple_of((1 - h) * n_pad + t * tq, tq)      # positive partners
    q = reps_ref[pl.ds(row0, tq), :]                         # (tq, d_pad)
    partner = reps_ref[pl.ds(prt0, tq), :]                   # (tq, d_pad)

    # Positives: row-wise dot with the partner rows (replaces the full
    # (2N,2N) pos-mask multiply/reduce of the previous version).
    pos = jnp.sum(q * partner, axis=1, keepdims=True)        # (tq, 1)

    # Similarity tile vs. all keys, contracting the shared feature dim so no
    # explicit transpose of reps is materialized.
    # (Perf option, not enabled: cast q/reps to bf16 here with f32 accumulation
    #  for native MXU rate, at ~1e-3 accuracy cost vs. the f32 reference.)
    sim = jax.lax.dot_general(
        q, reps_ref[...], (((1,), (1,)), ((), ())),
        preferred_element_type=jnp.float32)                  # (tq, 2*n_pad)

    # denominator = sum_{c != self, c valid} exp(sim/T).
    # Rows are unit norm, so the self term is exp(1/T); each zero-padded key
    # row contributes exp(0) = 1 and there are 2*(n_pad - n_true) of them.
    self_and_pad = math.exp(inv_t) + 2.0 * (n_pad - n_true)
    denom = (jnp.sum(jnp.exp(sim * inv_t), axis=1, keepdims=True)
             - self_and_pad)                                 # (tq, 1)

    # -log(exp(pos/T)/denom) == log(denom) - pos/T  (no extra exp / divide)
    loss_rows = jnp.log(denom) - pos * inv_t                 # (tq, 1)

    if n_pad != n_true:  # zero out padded query rows (their denom is garbage)
        local = t * tq + jax.lax.broadcasted_iota(jnp.int32, (tq, 1), 0)
        loss_rows = jnp.where(local < n_true, loss_rows, 0.0)

    acc_ref[0] += jnp.sum(loss_rows) * (0.5 / n_true)        # sum / (2N)
    out_ref[0, 0] = acc_ref[0]


def contrastive_loss(emb_i, emb_j, temperature: float = 0.5):
    assert emb_i.shape == emb_j.shape and emb_i.ndim == 2
    n, d = emb_i.shape

    d_pad = _round_up(d, 128)                    # lane-dense feature axis
    tq = 256 if n >= 256 else _round_up(n, 8)    # query-row tile (f32 sublane 8)
    n_pad = _round_up(n, tq)
    # Keep per-step sim/exp temporaries within a v7x-safe VMEM budget.
    while tq > 8 and (4 * tq * 2 * n_pad * 4) > (16 << 20):
        tq //= 2
        n_pad = _round_up(n, tq)
    nt = n_pad // tq
    grid = (2, nt)

    def _pad(x):
        return jnp.pad(x.astype(jnp.float32), ((0, n_pad - n), (0, d_pad - d)))

    # Layout plumbing in XLA: pad + stack the two embedding halves.
    emb = jnp.concatenate([_pad(emb_i), _pad(emb_j)], axis=0)  # (2*n_pad, d_pad)

    # ---- kernel 1: exp + L2 normalize (independent row tiles) ---------------
    reps = pl.pallas_call(
        functools.partial(_normalize_kernel, n_true=n, d_true=d,
                          n_pad=n_pad, d_pad=d_pad, tq=tq),
        out_shape=jax.ShapeDtypeStruct((2 * n_pad, d_pad), jnp.float32),
        grid=grid,
        in_specs=[pl.BlockSpec((tq, d_pad), lambda h, t: (h * nt + t, 0))],
        out_specs=pl.BlockSpec((tq, d_pad), lambda h, t: (h * nt + t, 0)),
        compiler_params=pltpu.CompilerParams(
            dimension_semantics=("parallel", "parallel")),
    )(emb)

    # ---- kernel 2: tiled NT-Xent reduction ----------------------------------
    reps_bytes = 2 * n_pad * d_pad * 4
    vmem_est = 2 * reps_bytes + 4 * tq * 2 * n_pad * 4 + 2 * tq * d_pad * 4
    cp = {"dimension_semantics": ("arbitrary", "arbitrary")}
    if vmem_est > (30 << 20):
        # TODO(synk): for very large N*D also tile the key axis instead of
        # keeping all of `reps` VMEM-resident.
        cp["vmem_limit_bytes"] = int(min(vmem_est + (8 << 20), 96 << 20))

    out = pl.pallas_call(
        functools.partial(_ntxent_kernel, n_true=n, n_pad=n_pad, tq=tq,
                          temperature=float(temperature)),
        out_shape=jax.ShapeDtypeStruct((1, 1), jnp.float32),
        grid=grid,
        in_specs=[pl.BlockSpec((2 * n_pad, d_pad), lambda h, t: (0, 0))],
        out_specs=pl.BlockSpec(memory_space=pltpu.MemorySpace.SMEM),
        scratch_shapes=[pltpu.SMEM((1,), jnp.float32)],
        compiler_params=pltpu.CompilerParams(**cp),
    )(reps)
    return out[0, 0]


def _reference(emb_i, emb_j, temperature: float = 0.5):
    # Pure-JAX reference mirroring the PyTorch module.
    n = emb_i.shape[0]
    m = 2 * n

    def _l2norm(x):
        norm = jnp.sqrt(jnp.sum(x * x, axis=1, keepdims=True))
        return x / jnp.maximum(norm, 1e-12)

    z_i = _l2norm(jnp.exp(emb_i.astype(jnp.float32)))
    z_j = _l2norm(jnp.exp(emb_j.astype(jnp.float32)))
    reps = jnp.concatenate([z_i, z_j], axis=0)
    sim = reps @ reps.T
    sim_ij = jnp.diagonal(sim, offset=n)
    sim_ji = jnp.diagonal(sim, offset=-n)
    positives = jnp.concatenate([sim_ij, sim_ji], axis=0)
    neg_mask = 1.0 - jnp.eye(m, dtype=jnp.float32)
    nominator = jnp.exp(positives / temperature)
    denominator = jnp.sum(neg_mask * jnp.exp(sim / temperature), axis=1)
    return jnp.sum(-jnp.log(nominator / denominator)) / m


if __name__ == "__main__":
    batch_size = 2   # module's `batch_size`; inputs are (batch, hidden)
    hidden = 32
    temperature = 0.5

    key = jax.random.PRNGKey(0)
    k_i, k_j = jax.random.split(key)
    emb_i = jax.random.normal(k_i, (batch_size, hidden), dtype=jnp.float32)
    emb_j = jax.random.normal(k_j, (batch_size, hidden), dtype=jnp.float32)

    loss = jax.block_until_ready(contrastive_loss(emb_i, emb_j, temperature))
    ref = jax.block_until_ready(_reference(emb_i, emb_j, temperature))
    assert jnp.allclose(loss, ref, rtol=1e-5, atol=1e-5), (loss, ref)

    print("KERNEL_OK")
</pallas_src>

<mosaic_0001>
module attributes {stable_mosaic.version = 11 : i64} {
  func.func @_normalize_kernel(%arg0: i32, %arg1: i32, %arg2: memref<8x128xf32, #tpu.memory_space<vmem>>, %arg3: memref<8x128xf32, #tpu.memory_space<vmem>>) attributes {dimension_semantics = [#tpu.dimension_semantics<parallel>, #tpu.dimension_semantics<parallel>], iteration_bounds = array<i64: 2, 1>, scalar_prefetch = 0 : i64, scratch_operands = 0 : i64, tpu.core_type = #tpu.core_type<tc>, window_params = [{transform_indices = @transform_0, window_bounds = array<i64: 8, 128>}, {transform_indices = @transform_1, window_bounds = array<i64: 8, 128>}]} {
    %c0 = arith.constant 0 : index
    %c0_0 = arith.constant 0 : index
    %0 = vector.load %arg2[%c0, %c0_0] : memref<8x128xf32, #tpu.memory_space<vmem>>, vector<8x128xf32>
    %1 = math.exp %0 : vector<8x128xf32>
    %2 = tpu.iota {dimensions = array<i32: 1>} : vector<8x128xi32>
    %c8_i32 = arith.constant 8 : i32
    %3 = arith.muli %arg1, %c8_i32 : i32
    %4 = tpu.iota {dimensions = array<i32: 0>} : vector<8x128xi32>
    %5 = vector.broadcast %3 : i32 to vector<8x128xi32>
    %6 = arith.addi %5, %4 : vector<8x128xi32>
    %c32_i32 = arith.constant 32 : i32
    %7 = vector.broadcast %c32_i32 : i32 to vector<8x128xi32>
    %8 = arith.cmpi slt, %2, %7 : vector<8x128xi32>
    %c2_i32 = arith.constant 2 : i32
    %9 = vector.broadcast %c2_i32 : i32 to vector<8x128xi32>
    %10 = arith.cmpi slt, %6, %9 : vector<8x128xi32>
    %11 = arith.andi %8, %10 : vector<8x128xi1>
    %cst = arith.constant 0.000000e+00 : f32
    %12 = vector.broadcast %cst : f32 to vector<8x128xf32>
    %13 = arith.select %11, %1, %12 : vector<8x128xi1>, vector<8x128xf32>
    %14 = arith.mulf %13, %13 : vector<8x128xf32>
    %cst_1 = arith.constant dense<0.000000e+00> : vector<8xf32>
    %15 = vector.multi_reduction <add>, %14, %cst_1 [1] : vector<8x128xf32> to vector<8xf32>
    %16 = vector.shape_cast %15 : vector<8xf32> to vector<8x1xf32>
    %cst_2 = arith.constant 1.000000e-24 : f32
    %17 = vector.broadcast %cst_2 : f32 to vector<8x1xf32>
    %18 = arith.maximumf %16, %17 : vector<8x1xf32>
    %19 = math.rsqrt %18 : vector<8x1xf32>
    %20 = vector.broadcast %19 : vector<8x1xf32> to vector<8x128xf32>
    %21 = arith.mulf %13, %20 : vector<8x128xf32>
    %c0_3 = arith.constant 0 : index
    %c0_4 = arith.constant 0 : index
    %22 = vector.load %arg3[%c0_3, %c0_4] : memref<8x128xf32, #tpu.memory_space<vmem>>, vector<8x128xf32>
    tpu.vector_store %arg3[%c0_3, %c0_4], %21 {strides = array<i32>} : memref<8x128xf32, #tpu.memory_space<vmem>>, vector<8x128xf32>,
    return
  }
  func.func @transform_0(%arg0: i32, %arg1: i32) -> (i32, i32) {
    %c1_i32 = arith.constant 1 : i32
    %0 = arith.muli %arg0, %c1_i32 : i32
    %1 = arith.addi %0, %arg1 : i32
    %c0_i32 = arith.constant 0 : i32
    %c0_i32_0 = arith.constant 0 : i32
    return %1, %c0_i32 : i32, i32
  }
  func.func @transform_1(%arg0: i32, %arg1: i32) -> (i32, i32) {
    %c1_i32 = arith.constant 1 : i32
    %0 = arith.muli %arg0, %c1_i32 : i32
    %1 = arith.addi %0, %arg1 : i32
    %c0_i32 = arith.constant 0 : i32
    %c0_i32_0 = arith.constant 0 : i32
    return %1, %c0_i32 : i32, i32
  }
}

</mosaic_0001>

<llo_original>
// kernel: tpu_custom_call.1
$region0: #{tpu_custom_call.1}
  #allocation0 [shape = 'u32[]', space=smem, size = 0x4, offset = 0x4, fixed_abs, tag = 'smem constant byte address 0x4 - core index']
  #allocation1 [shape = 'u32[144,128]{1,0:T(1,128)}', space=vmem, size = 0x12000, scoped, tag = 'internal scratch']
  %s0 = inlined_call_operand.hbm [shape: f32[16,128], index: 0, kind: input, shape index: {}]
  %s1 = inlined_call_operand.hbm [shape: f32[16,128], index: 1, kind: output, shape index: {}]
  %s2 = sld [smem:[#allocation0]]
  $region41: #{tpu_custom_call.1} parent=0
    _
  %s4 = ssub.s32 1, %s2
  %s5 = scalar_select 0, %s4, %s2
  $region1: #{tpu_custom_call.1} parent=0
    #allocation2 [shape = 'u8[8192]{0}', space=vmem, size = 0x2000, scoped, tag = 'input window, operand 0']
    #allocation3 [shape = 's32[2]{0}', space=sflag, size = 0x8, scoped, tag = 'scoped memory for tpu_custom_call.1']
    #allocation4 [shape = 's32[2]{0}', space=sflag, size = 0x8, scoped, tag = 'scoped memory for tpu_custom_call.1']
    #allocation5 [shape = 'u8[8192]{0}', space=vmem, size = 0x2000, scoped, tag = 'output window, operand 0']
    %6 = vsyncpa [#allocation3], 0
    %s7 = scalar_lea.sflag [#allocation3], 1
    %8 = vsyncpa %s7, 0
    %9 = vsyncpa [#allocation4], 0
    %s10 = scalar_lea.sflag [#allocation4], 1
    %11 = vsyncpa %s10, 0
    loop: start=0, step=1, limit=4
    $region2: #{tpu_custom_call.1} parent=1 // loop_pre_header
      _
    $region3: #{tpu_custom_call.1} parent=1 // loop_header
      %s13 = sphi 0, %s17
      %p14 = scmp.ge.s32.totalorder %s13, 4
      %s20 = sphi 0, %s32
      %s21 = sphi 0, %s28
      %s22 = sphi 0, %s20
      %s23 = sphi 0, %s21
      %s24 = sphi 0, %s22
      %s25 = sphi 0, %s23
      %s37 = sphi 0, %s39
      %s40 = sphi 0, %s37
      %s41 = sphi 0, %s40
      %s57 = sphi 0, %s41
      %s65 = sphi 0, %s67
      %s68 = sphi 0, %s65
      %s69 = sphi 0, %s68
      %s85 = sphi 0, %s69
    $region4: #{tpu_custom_call.1} parent=1 // loop_header_branch
      %16 = sbr.rel (%p14) target = $region8
    $region5: #{tpu_custom_call.1} parent=1 // loop_body
      %s18 = ssub.s32 %s13, 1
      %s19 = ssub.s32 %s13, 2
      %s26 = sadd.s32 1, %s21
      %p27 = scmp.ge.s32.totalorder %s26, 1
      %s28 = scalar_select %p27, 0, %s26
      %s29 = sadd.s32 1, %s20
      %s30 = scalar_select %p27, %s29, %s20
      %p31 = scmp.ge.s32.totalorder %s30, 2
      %s32 = scalar_select %p31, 0, %s30
      %s33 = sadd.s32 %s20, %s21
      %s34 = sadd.s32 %s32, %s28
      %s35 = ssub.s32 %s33, %s34
      %p36 = scmp.eq.s32.totalorder %s35, 0
      %s38 = sadd.s32 %s37, 1
      %s39 = scalar_select %p36, %s37, %s38
      %p42 = pneg %p36
      %p43 = scmp.eq.s32.totalorder %s13, 1
      %p44 = por %p42, %p43
      %p45 = scmp.ne.s32.totalorder %s37, %s40
      %p46 = scmp.eq.s32.totalorder %s13, 0
      %p47 = por %p45, %p46
      %p48 = scmp.ne.s32.totalorder %s37, %s40
      %p49 = scmp.eq.s32.totalorder %s18, 1
      %p50 = por %p48, %p49
      %p51 = scmp.ne.s32.totalorder %s40, %s41
      %p52 = scmp.eq.s32.totalorder %s18, 0
      %p53 = por %p51, %p52
      %p54 = scmp.ne.s32.totalorder %s40, %s41
      %p55 = scmp.eq.s32.totalorder %s19, 1
      %p56 = por %p54, %p55
      %p58 = scmp.ne.s32.totalorder %s41, %s57
      %p59 = scmp.eq.s32.totalorder %s19, 0
      %p60 = por %p58, %p59
      %s61 = sadd.s32 %s20, %s21
      %s62 = sadd.s32 %s32, %s28
      %s63 = ssub.s32 %s61, %s62
      %p64 = scmp.eq.s32.totalorder %s63, 0
      %s66 = sadd.s32 %s65, 1
      %s67 = scalar_select %p64, %s65, %s66
      %p70 = pneg %p64
      %p71 = scmp.eq.s32.totalorder %s13, 1
      %p72 = por %p70, %p71
      %p73 = scmp.ne.s32.totalorder %s65, %s68
      %p74 = scmp.eq.s32.totalorder %s13, 0
      %p75 = por %p73, %p74
      %p76 = scmp.ne.s32.totalorder %s65, %s68
      %p77 = scmp.eq.s32.totalorder %s18, 1
      %p78 = por %p76, %p77
      %p79 = scmp.ne.s32.totalorder %s68, %s69
      %p80 = scmp.eq.s32.totalorder %s18, 0
      %p81 = por %p79, %p80
      %p82 = scmp.ne.s32.totalorder %s68, %s69
      %p83 = scmp.eq.s32.totalorder %s19, 1
      %p84 = por %p82, %p83
      %p86 = scmp.ne.s32.totalorder %s69, %s85
      %p87 = scmp.eq.s32.totalorder %s19, 0
      %p88 = por %p86, %p87
      %p89 = scmp.le.s32.totalorder 1, %s13
      %p90 = scmp.lt.s32.totalorder %s13, 3
      %p91 = pnand %p89, %p90
      %p92 = pneg %p91
      // Predicated region
      $region9: #{tpu_custom_call.1} parent=5 // pred_check
        _
      $region10: #{tpu_custom_call.1} parent=5 // pred_check_branch
        %94 = sbr.rel (%p91) target = $region12
      $region11: #{tpu_custom_call.1} parent=5 // pred_region
        %s95 = ssub.s32 %s13, 1
      $region12: #{tpu_custom_call.1} parent=5 // pred_fallthru
        _
      %p96 = scmp.lt.s32.totalorder %s13, 2
      // Predicated region
      $region13: #{tpu_custom_call.1} parent=5 // pred_check
        %p97 = pneg %p96
      $region14: #{tpu_custom_call.1} parent=5 // pred_check_branch
        %99 = sbr.rel (%p97) target = $region16
      $region15: #{tpu_custom_call.1} parent=5 // pred_region
        // Predicated region
        $region17: #{tpu_custom_call.1} parent=15 // pred_check
          %p100 = pneg %p47
        $region18: #{tpu_custom_call.1} parent=15 // pred_check_branch
          %102 = sbr.rel (%p100) target = $region20
        $region19: #{tpu_custom_call.1} parent=15 // pred_region
          %s103 = sand.u32 %s37, 1
          %s104 = scalar_lea.sflag [#allocation3], %s103
          %s105 = sand.u32 %s37, 1
          %s106 = smul.addr %s105, 8
          %s107 = scalar_lea.vmem [#allocation2], %s106
          %s108 = sadd.s32 %s20, %s21
          %s110 = ssub.s32 128, 128
          %111 = vsyncadd %s104, %s110
          %s112 = smul.addr %s108, 128
          %s113 = scalar_lea.hbm %s0, %s112
          %s115 = sshll.u32 %s107, 4
          %s116 = int_to_ptr.vmem [resolvable:$true] %s115
          %118 = dma.hbm_to_vmem [thread:$0]  %s113, 128, %s116, %s104
        $region20: #{tpu_custom_call.1} parent=15 // pred_fallthru
          _
      $region16: #{tpu_custom_call.1} parent=5 // pred_fallthru
        _
      %p119 = scmp.le.s32.totalorder 1, %s13
      %p120 = scmp.lt.s32.totalorder %s13, 3
      %p121 = pnand %p119, %p120
      %p122 = pneg %p121
      // Predicated region
      $region21: #{tpu_custom_call.1} parent=5 // pred_check
        _
      $region22: #{tpu_custom_call.1} parent=5 // pred_check_branch
        %124 = sbr.rel (%p121) target = $region24
      $region23: #{tpu_custom_call.1} parent=5 // pred_region
        %s125 = ssub.s32 %s13, 1
        %s126 = sand.u32 %s40, 1
        %s127 = scalar_lea.sflag [#allocation3], %s126
        %s128 = sand.u32 %s40, 1
        %s129 = smul.addr %s128, 8
        %s130 = scalar_lea.vmem [#allocation2], %s129
        // Predicated region
        $region25: #{tpu_custom_call.1} parent=23 // pred_check
          %p131 = pneg %p53
        $region26: #{tpu_custom_call.1} parent=23 // pred_check_branch
          %133 = sbr.rel (%p131) target = $region28
        $region27: #{tpu_custom_call.1} parent=23 // pred_region
          %134 = dma.done %s127, 128
        $region28: #{tpu_custom_call.1} parent=23 // pred_fallthru
          _
        %s135 = sand.u32 %s40, 1
        %s136 = scalar_lea.sflag [#allocation3], %s135
        %s137 = sand.u32 %s40, 1
        %s138 = smul.addr %s137, 8
        %s139 = scalar_lea.vmem [#allocation2], %s138
        %p140 = pneg %p53
        %p141 = pneg %p50
        %p142 = pneg %p81
        %p143 = pneg %p78
        %s144 = sand.u32 %s68, 1
        %s145 = scalar_lea.sflag [#allocation4], %s144
        %s146 = sand.u32 %s68, 1
        %s147 = smul.addr %s146, 8
        %s148 = scalar_lea.vmem [#allocation5], %s147
        %s149 = sadd.s32 %s22, %s23
        %s150 = sadd.s32 %s22, %s23
        %v151 = vld [vmem:[%s130] sm:$0xff]
        %v152 = vmul.f32 %v151, 1.442695
        %v153 = vpow.pop %v152
        %v154 = vlaneseq
        %v155 = vand.u32 %v154, 127
        %s156 = smul.u32 %s23, 8
        %v157 = vlaneseq
        %v158 = vshrl.u32 %v157, 7
        %v159 = vstv %s156
        %v160 = vadd.s32 %v159, %v158
        %vm161 = vcmp.lt.s32.totalorder %v155, 32
        %vm162 = vcmp.lt.s32.totalorder %v160, 2
        %vm163 = vmand %vm161, %vm162
        %v164 = vsel %vm163, %v153, 0.0
        %v165 = vmul.f32 %v164, %v164
        %166 = vadd.xlane.f32.xlu0 %v165
        %v167 = vpop.xlane.xlu0 %166
        %v168 = vmax.f32 %v167, 1e-24
        %v169 = vrsqrt.pop %v168
        %v170 = vmul.f32 %v164, %v169
        %171 = vst [vmem:[%s148] sm:$0xff] %v170
        %s172 = sand.u32 %s68, 1
        %s173 = scalar_lea.sflag [#allocation4], %s172
        %s174 = sand.u32 %s68, 1
        %s175 = smul.addr %s174, 8
        %s176 = scalar_lea.vmem [#allocation5], %s175
        // Predicated region
        $region29: #{tpu_custom_call.1} parent=23 // pred_check
          %p177 = pneg %p78
        $region30: #{tpu_custom_call.1} parent=23 // pred_check_branch
          %179 = sbr.rel (%p177) target = $region32
        $region31: #{tpu_custom_call.1} parent=23 // pred_region
          %s180 = sadd.s32 %s22, %s23
          %s182 = ssub.s32 128, 128
          %183 = vsyncadd %s173, %s182
          %s184 = smul.addr %s180, 128
          %s185 = scalar_lea.hbm %s1, %s184
          %s187 = sshll.u32 %s176, 4
          %s188 = int_to_ptr.vmem [resolvable:$true] %s187
          %190 = dma.vmem_to_hbm [thread:$0]  %s188, 128, %s185, %s173
        $region32: #{tpu_custom_call.1} parent=23 // pred_fallthru
          _
      $region24: #{tpu_custom_call.1} parent=5 // pred_fallthru
        _
      %p191 = scmp.le.s32.totalorder 2, %s13
      // Predicated region
      $region33: #{tpu_custom_call.1} parent=5 // pred_check
        %p192 = pneg %p191
      $region34: #{tpu_custom_call.1} parent=5 // pred_check_branch
        %194 = sbr.rel (%p192) target = $region36
      $region35: #{tpu_custom_call.1} parent=5 // pred_region
        %s195 = ssub.s32 %s13, 2
        // Predicated region
        $region37: #{tpu_custom_call.1} parent=35 // pred_check
          %p196 = pneg %p84
        $region38: #{tpu_custom_call.1} parent=35 // pred_check_branch
          %198 = sbr.rel (%p196) target = $region40
        $region39: #{tpu_custom_call.1} parent=35 // pred_region
          %s199 = sand.u32 %s69, 1
          %s200 = scalar_lea.sflag [#allocation4], %s199
          %s201 = sand.u32 %s69, 1
          %s202 = smul.addr %s201, 8
          %s203 = scalar_lea.vmem [#allocation5], %s202
          %204 = dma.done %s200, 128
        $region40: #{tpu_custom_call.1} parent=35 // pred_fallthru
          _
      $region36: #{tpu_custom_call.1} parent=5 // pred_fallthru
        _
    $region6: #{tpu_custom_call.1} parent=1 // loop_footer
      %s17 = sadd.s32 1, %s13
    $region7: #{tpu_custom_call.1} parent=1 // loop_footer_branch
      %12 = sbr.rel target = $region3
    $region8: #{tpu_custom_call.1} parent=1 // loop_exit
      _
    %205 = vsyncpa [#allocation3], 1
    %s206 = scalar_lea.sflag [#allocation3], 1
    %207 = vsyncpa %s206, 1
    %208 = vsyncpa [#allocation4], 1
    %s209 = scalar_lea.sflag [#allocation4], 1
    %210 = vsyncpa %s209, 1

</llo_original>
